<compile_context>
chip_gen: v7x
topology: tpu7x:2x2x1
jax: 0.10.0
libtpu: 0.0.40
codegen_flags: <defaults>
</compile_context>

<pallas_src>
import jax
import jax.numpy as jnp
from jax.experimental import pallas as pl
from jax.experimental.pallas import tpu as pltpu

IN_FEATURES = 512
HIDDEN = 128
OUT_FEATURES = 10
OUT_PADDED = 128      # lane-dense padded fc1 width (real cols 0..9, rest zero)
MAX_BLOCK_B = 1024    # max rows per grid step
SUBLANE = 16          # lcm of f32 (8) and bf16 (16) sublane packing


def _round_up(n: int, m: int) -> int:
    return ((n + m - 1) // m) * m


def _choose_batch_tile(B: int) -> int:
    if B <= SUBLANE:
        return SUBLANE
    # Aim for >= 2 parallel grid steps (v7x megacore), cap at MAX_BLOCK_B rows.
    tb = _round_up(pl.cdiv(B, 2), SUBLANE)
    return min(tb, MAX_BLOCK_B)


def mlp_kernel(x_ref, w0_ref, b0_ref, w1_ref, b1_ref, o_ref):
    # x arrives f32; cast to bf16 in VMEM right before the MXU op so the
    # wrapper never does a separate HBM cast pass.
    x_bf16 = x_ref[...].astype(jnp.bfloat16)
    # fc0: (TB, 512) bf16 @ (512, 128) bf16 -> f32 accumulate on the MXU.
    h = jnp.dot(x_bf16, w0_ref[...], preferred_element_type=jnp.float32)
    # Bias add + ReLU in f32 (VPU-friendly on v5e).
    h = jnp.maximum(h + b0_ref[...], 0.0)
    # fc1 (padded to N=128): (TB, 128) bf16 @ (128, 128) bf16 -> f32.
    out = jnp.dot(h.astype(jnp.bfloat16), w1_ref[...],
                  preferred_element_type=jnp.float32) + b1_ref[...]
    # Lane-dense bf16 store; wrapper slices the 10 real columns.
    o_ref[...] = out.astype(o_ref.dtype)


def mlp_forward(x, w0, b0, w1, b1):
    """x: (B, 512) f32; w0: (512,128) bf16; b0: (1,128) f32;
    w1: (128,128) bf16 (cols 10.. zero); b1: (1,128) f32 (cols 10.. zero).
    Returns (B, 10) f32."""
    B = x.shape[0]
    assert x.shape[1] == IN_FEATURES
    x = x.astype(jnp.float32)           # no-op if already f32; kernel casts to bf16

    tb = _choose_batch_tile(B)
    grid = (pl.cdiv(B, tb),)            # partial tail block masked by Pallas

    cost = pl.CostEstimate(
        flops=2 * grid[0] * tb * (IN_FEATURES * HIDDEN + HIDDEN * OUT_PADDED),
        transcendentals=0,
        bytes_accessed=(B * IN_FEATURES * 4            # x (f32)
                        + IN_FEATURES * HIDDEN * 2     # w0 (bf16)
                        + HIDDEN * OUT_PADDED * 2      # w1 (bf16)
                        + (HIDDEN + OUT_PADDED) * 4    # biases (f32)
                        + B * OUT_PADDED * 2),         # output (bf16)
    )

    out = pl.pallas_call(
        mlp_kernel,
        out_shape=jax.ShapeDtypeStruct((B, OUT_PADDED), jnp.bfloat16),
        grid_spec=pltpu.PrefetchScalarGridSpec(
            num_scalar_prefetch=0,
            grid=grid,
            in_specs=[
                pl.BlockSpec((tb, IN_FEATURES), lambda i: (i, 0)),
                # Constant block index -> weights/biases stay resident in VMEM.
                pl.BlockSpec((IN_FEATURES, HIDDEN), lambda i: (0, 0)),
                pl.BlockSpec((1, HIDDEN), lambda i: (0, 0)),
                pl.BlockSpec((HIDDEN, OUT_PADDED), lambda i: (0, 0)),
                pl.BlockSpec((1, OUT_PADDED), lambda i: (0, 0)),
            ],
            out_specs=pl.BlockSpec((tb, OUT_PADDED), lambda i: (i, 0)),
        ),
        compiler_params=pltpu.CompilerParams(
            dimension_semantics=("parallel",),   # batch axis -> both TCs on v7x
        ),
        cost_estimate=cost,
    )(x, w0, b0, w1, b1)

    return out[:, :OUT_FEATURES].astype(jnp.float32)


def mlp_reference(x, w0, b0, w1, b1):
    """Pure-JAX reference mirroring the kernel's bf16/f32 dtype handling."""
    xb = x.astype(jnp.bfloat16).astype(jnp.float32)
    h = jnp.maximum(xb @ w0.astype(jnp.float32) + b0, 0.0)
    hb = h.astype(jnp.bfloat16).astype(jnp.float32)
    out = hb @ w1.astype(jnp.float32) + b1
    out = out.astype(jnp.bfloat16).astype(jnp.float32)
    return out[:, :OUT_FEATURES]


class Model:
    """JAX/Pallas port of the PyTorch Model (Linear(512,128) -> ReLU -> Linear(128,10))."""

    def __init__(self, key):
        k0, k1, k2, k3 = jax.random.split(key, 4)
        bound0 = 1.0 / jnp.sqrt(512.0)
        bound1 = 1.0 / jnp.sqrt(128.0)
        # Weights stored transposed (in, out), bf16 for the MXU bf16 path.
        self.w0 = jax.random.uniform(
            k0, (IN_FEATURES, HIDDEN), jnp.float32, -bound0, bound0
        ).astype(jnp.bfloat16)
        self.b0 = jax.random.uniform(k1, (1, HIDDEN), jnp.float32, -bound0, bound0)
        # fc1 padded to 128 output lanes; padded columns are exactly zero.
        w1_real = jax.random.uniform(
            k2, (HIDDEN, OUT_FEATURES), jnp.float32, -bound1, bound1
        ).astype(jnp.bfloat16)
        self.w1 = jnp.zeros((HIDDEN, OUT_PADDED), jnp.bfloat16).at[:, :OUT_FEATURES].set(w1_real)
        b1_real = jax.random.uniform(k3, (1, OUT_FEATURES), jnp.float32, -bound1, bound1)
        self.b1 = jnp.zeros((1, OUT_PADDED), jnp.float32).at[:, :OUT_FEATURES].set(b1_real)

    def __call__(self, x1):
        # x1.view((1, -1)) -- glue reshape in plain JAX (keeps original semantics).
        x = jnp.reshape(x1, (1, -1)).astype(jnp.float32)
        assert x.shape == (1, IN_FEATURES), (
            f"flattened input must have {IN_FEATURES} features, got {x.shape}")
        return mlp_forward(x, self.w0, self.b0, self.w1, self.b1)


if __name__ == "__main__":
    key = jax.random.PRNGKey(0)
    kx, kp, kb = jax.random.split(key, 3)

    # Input chosen so that view((1,-1)) yields 512 features, as fc0 requires.
    x1 = jax.random.uniform(kx, (1, 2, 16, 16), jnp.float32)

    model = Model(kp)
    out = jax.block_until_ready(model(x1))
    assert out.shape == (1, OUT_FEATURES)

    ref = mlp_reference(jnp.reshape(x1, (1, -1)),
                        model.w0, model.b0, model.w1, model.b1)
    assert jnp.allclose(out, ref, atol=1e-2, rtol=1e-2), (out, ref)

    # Batched path (grid > 1, non-divisible tail block exercised: B=19, tb=16).
    xb_batch = jax.random.uniform(kb, (19, IN_FEATURES), jnp.float32)
    out_b = jax.block_until_ready(
        mlp_forward(xb_batch, model.w0, model.b0, model.w1, model.b1))
    assert out_b.shape == (19, OUT_FEATURES)
    ref_b = mlp_reference(xb_batch, model.w0, model.b0, model.w1, model.b1)
    assert jnp.allclose(out_b, ref_b, atol=1e-2, rtol=1e-2), (out_b, ref_b)

    print("KERNEL_OK")
</pallas_src>

<mosaic_0001>
module attributes {stable_mosaic.version = 11 : i64} {
  func.func @mlp_kernel(%arg0: i32, %arg1: memref<16x512xf32, #tpu.memory_space<vmem>>, %arg2: memref<512x128xbf16, #tpu.memory_space<vmem>>, %arg3: memref<1x128xf32, #tpu.memory_space<vmem>>, %arg4: memref<128x128xbf16, #tpu.memory_space<vmem>>, %arg5: memref<1x128xf32, #tpu.memory_space<vmem>>, %arg6: memref<16x128xbf16, #tpu.memory_space<vmem>>) attributes {dimension_semantics = [#tpu.dimension_semantics<parallel>], iteration_bounds = array<i64: 1>, scalar_prefetch = 0 : i64, scratch_operands = 0 : i64, tpu.core_type = #tpu.core_type<tc>, window_params = [{transform_indices = @transform_0, window_bounds = array<i64: 16, 512>}, {pipeline_mode = #tpu.pipeline_mode<synchronous>, transform_indices = @transform_1, window_bounds = array<i64: 512, 128>}, {pipeline_mode = #tpu.pipeline_mode<synchronous>, transform_indices = @transform_2, window_bounds = array<i64: 1, 128>}, {pipeline_mode = #tpu.pipeline_mode<synchronous>, transform_indices = @transform_3, window_bounds = array<i64: 128, 128>}, {pipeline_mode = #tpu.pipeline_mode<synchronous>, transform_indices = @transform_4, window_bounds = array<i64: 1, 128>}, {transform_indices = @transform_5, window_bounds = array<i64: 16, 128>}]} {
    %c0 = arith.constant 0 : index
    %c0_0 = arith.constant 0 : index
    %0 = vector.load %arg1[%c0, %c0_0] : memref<16x512xf32, #tpu.memory_space<vmem>>, vector<16x512xf32>
    %1 = arith.truncf %0 : vector<16x512xf32> to vector<16x512xbf16>
    %c0_1 = arith.constant 0 : index
    %c0_2 = arith.constant 0 : index
    %2 = vector.load %arg2[%c0_1, %c0_2] : memref<512x128xbf16, #tpu.memory_space<vmem>>, vector<512x128xbf16>
    %cst = arith.constant dense<0.000000e+00> : vector<16x128xf32>
    %3 = tpu.matmul %1, %2, %cst {dimension_numbers = #tpu.dot_dimension_numbers<[1], [0], [0], [1], [0, 0, 1, 1], [], []>} : vector<16x512xbf16>, vector<512x128xbf16>, vector<16x128xf32> -> vector<16x128xf32>
    %c0_3 = arith.constant 0 : index
    %c0_4 = arith.constant 0 : index
    %4 = vector.load %arg3[%c0_3, %c0_4] : memref<1x128xf32, #tpu.memory_space<vmem>>, vector<1x128xf32>
    %5 = vector.broadcast %4 : vector<1x128xf32> to vector<16x128xf32>
    %6 = arith.addf %3, %5 : vector<16x128xf32>
    %cst_5 = arith.constant 0.000000e+00 : f32
    %7 = vector.broadcast %cst_5 : f32 to vector<16x128xf32>
    %8 = arith.maximumf %6, %7 : vector<16x128xf32>
    %9 = arith.truncf %8 : vector<16x128xf32> to vector<16x128xbf16>
    %c0_6 = arith.constant 0 : index
    %c0_7 = arith.constant 0 : index
    %10 = vector.load %arg4[%c0_6, %c0_7] : memref<128x128xbf16, #tpu.memory_space<vmem>>, vector<128x128xbf16>
    %cst_8 = arith.constant dense<0.000000e+00> : vector<16x128xf32>
    %11 = tpu.matmul %9, %10, %cst_8 {dimension_numbers = #tpu.dot_dimension_numbers<[1], [0], [0], [1], [0, 0, 1, 1], [], []>} : vector<16x128xbf16>, vector<128x128xbf16>, vector<16x128xf32> -> vector<16x128xf32>
    %c0_9 = arith.constant 0 : index
    %c0_10 = arith.constant 0 : index
    %12 = vector.load %arg5[%c0_9, %c0_10] : memref<1x128xf32, #tpu.memory_space<vmem>>, vector<1x128xf32>
    %13 = vector.broadcast %12 : vector<1x128xf32> to vector<16x128xf32>
    %14 = arith.addf %11, %13 : vector<16x128xf32>
    %15 = arith.truncf %14 : vector<16x128xf32> to vector<16x128xbf16>
    %c0_11 = arith.constant 0 : index
    %c0_12 = arith.constant 0 : index
    %16 = vector.load %arg6[%c0_11, %c0_12] : memref<16x128xbf16, #tpu.memory_space<vmem>>, vector<16x128xbf16>
    tpu.vector_store %arg6[%c0_11, %c0_12], %15 {strides = array<i32>} : memref<16x128xbf16, #tpu.memory_space<vmem>>, vector<16x128xbf16>,
    return
  }
  func.func @transform_0(%arg0: i32) -> (i32, i32) {
    %c0_i32 = arith.constant 0 : i32
    %c0_i32_0 = arith.constant 0 : i32
    return %arg0, %c0_i32 : i32, i32
  }
  func.func @transform_1(%arg0: i32) -> (i32, i32) {
    %c0_i32 = arith.constant 0 : i32
    %c0_i32_0 = arith.constant 0 : i32
    %c0_i32_1 = arith.constant 0 : i32
    return %c0_i32, %c0_i32_0 : i32, i32
  }
  func.func @transform_2(%arg0: i32) -> (i32, i32) {
    %c0_i32 = arith.constant 0 : i32
    %c0_i32_0 = arith.constant 0 : i32
    %c0_i32_1 = arith.constant 0 : i32
    return %c0_i32, %c0_i32_0 : i32, i32
  }
  func.func @transform_3(%arg0: i32) -> (i32, i32) {
    %c0_i32 = arith.constant 0 : i32
    %c0_i32_0 = arith.constant 0 : i32
    %c0_i32_1 = arith.constant 0 : i32
    return %c0_i32, %c0_i32_0 : i32, i32
  }
  func.func @transform_4(%arg0: i32) -> (i32, i32) {
    %c0_i32 = arith.constant 0 : i32
    %c0_i32_0 = arith.constant 0 : i32
    %c0_i32_1 = arith.constant 0 : i32
    return %c0_i32, %c0_i32_0 : i32, i32
  }
  func.func @transform_5(%arg0: i32) -> (i32, i32) {
    %c0_i32 = arith.constant 0 : i32
    %c0_i32_0 = arith.constant 0 : i32
    return %arg0, %c0_i32 : i32, i32
  }
}

</mosaic_0001>

<llo_original>
// kernel: tpu_custom_call.1
$region0: #{tpu_custom_call.1}
  #allocation0 [shape = 'u32[]', space=smem, size = 0x4, offset = 0x4, fixed_abs, tag = 'smem constant byte address 0x4 - core index']
  #allocation1 [shape = 'u32[144,128]{1,0:T(1,128)}', space=vmem, size = 0x12000, scoped, tag = 'internal scratch']
  %s0 = inlined_call_operand.hbm [shape: f32[1,512], index: 0, kind: input, shape index: {}]
  %s1 = inlined_call_operand.hbm [shape: bf16[512,128], index: 1, kind: input, shape index: {}]
  %s2 = inlined_call_operand.vmem [shape: f32[1,128], index: 2, kind: input, shape index: {}]
  %s3 = inlined_call_operand.hbm [shape: bf16[128,128], index: 3, kind: input, shape index: {}]
  %s4 = inlined_call_operand.vmem [shape: f32[1,128], index: 4, kind: input, shape index: {}]
  %s5 = inlined_call_operand.hbm [shape: bf16[1,128], index: 5, kind: output, shape index: {}]
  %s6 = sld [smem:[#allocation0]]
  $region42: #{tpu_custom_call.1} parent=0
    _
  %s8 = ssub.s32 1, %s6
  %s9 = scalar_select 0, %s8, %s6
  $region1: #{tpu_custom_call.1} parent=0
    #allocation2 [shape = 'u8[32768]{0}', space=vmem, size = 0x8000, scoped, tag = 'input window, operand 0, single buffered']
    #allocation3 [shape = 's32[1]{0}', space=sflag, size = 0x4, scoped, tag = 'scoped memory for tpu_custom_call.1']
    #allocation4 [shape = 's32[1]{0}', space=sflag, size = 0x4, scoped, tag = 'scoped memory for tpu_custom_call.1']
    #allocation5 [shape = 'u8[131072]{0}', space=vmem, size = 0x20000, scoped, tag = 'input window, operand 1, single buffered']
    #allocation6 [shape = 's32[1]{0}', space=sflag, size = 0x4, scoped, tag = 'scoped memory for tpu_custom_call.1']
    #allocation7 [shape = 'u8[32768]{0}', space=vmem, size = 0x8000, scoped, tag = 'input window, operand 3, single buffered']
    #allocation8 [shape = 'u8[4096]{0}', space=vmem, size = 0x1000, scoped, tag = 'output window, operand 0, single buffered']
    %10 = vsyncpa [#allocation3], 0
    %11 = vsyncpa [#allocation6], 0
    %12 = vsyncpa [#allocation4], 0
    // Predicated region
    $region2: #{tpu_custom_call.1} parent=1 // pred_check
      _
    $region3: #{tpu_custom_call.1} parent=1 // pred_check_branch
      %14 = sbr.rel (0) target = $region5
    $region4: #{tpu_custom_call.1} parent=1 // pred_region
      %s16 = ssub.s32 1024, 64
      %17 = vsyncadd [#allocation3], %s16
      %s18 = sshll.u32 [#allocation2], 4
      %s19 = int_to_ptr.vmem [resolvable:$true] %s18
      %24 = dma.hbm_to_vmem [thread:$0]  %s0, 64, %s19, [#allocation3], 64, 64, 4
    $region5: #{tpu_custom_call.1} parent=1 // pred_fallthru
      _
    // Predicated region
    $region6: #{tpu_custom_call.1} parent=1 // pred_check
      _
    $region7: #{tpu_custom_call.1} parent=1 // pred_check_branch
      %26 = sbr.rel (0) target = $region9
    $region8: #{tpu_custom_call.1} parent=1 // pred_region
      %s28 = ssub.s32 4096, 4096
      %29 = vsyncadd [#allocation6], %s28
      %s30 = sshll.u32 [#allocation5], 4
      %s31 = int_to_ptr.vmem [resolvable:$true] %s30
      %36 = dma.hbm_to_vmem [thread:$0]  %s1, 4096, %s31, [#allocation6], 64, 64, 4
    $region9: #{tpu_custom_call.1} parent=1 // pred_fallthru
      _
    // Predicated region
    $region10: #{tpu_custom_call.1} parent=1 // pred_check
      _
    $region11: #{tpu_custom_call.1} parent=1 // pred_check_branch
      %38 = sbr.rel (0) target = $region13
    $region12: #{tpu_custom_call.1} parent=1 // pred_region
      _
    $region13: #{tpu_custom_call.1} parent=1 // pred_fallthru
      _
    // Predicated region
    $region14: #{tpu_custom_call.1} parent=1 // pred_check
      _
    $region15: #{tpu_custom_call.1} parent=1 // pred_check_branch
      %40 = sbr.rel (0) target = $region17
    $region16: #{tpu_custom_call.1} parent=1 // pred_region
      %s42 = ssub.s32 1024, 1024
      %43 = vsyncadd [#allocation6], %s42
      %s44 = sshll.u32 [#allocation7], 4
      %s45 = int_to_ptr.vmem [resolvable:$true] %s44
      %50 = dma.hbm_to_vmem [thread:$0]  %s3, 1024, %s45, [#allocation6], 64, 64, 4
    $region17: #{tpu_custom_call.1} parent=1 // pred_fallthru
      _
    // Predicated region
    $region18: #{tpu_custom_call.1} parent=1 // pred_check
      _
    $region19: #{tpu_custom_call.1} parent=1 // pred_check_branch
      %52 = sbr.rel (0) target = $region21
    $region20: #{tpu_custom_call.1} parent=1 // pred_region
      _
    $region21: #{tpu_custom_call.1} parent=1 // pred_fallthru
      _
    // Predicated region
    $region22: #{tpu_custom_call.1} parent=1 // pred_check
      _
    $region23: #{tpu_custom_call.1} parent=1 // pred_check_branch
      %54 = sbr.rel (0) target = $region25
    $region24: #{tpu_custom_call.1} parent=1 // pred_region
      %55 = dma.done [#allocation3], 1024
    $region25: #{tpu_custom_call.1} parent=1 // pred_fallthru
      _
    // Predicated region
    $region26: #{tpu_custom_call.1} parent=1 // pred_check
      _
    $region27: #{tpu_custom_call.1} parent=1 // pred_check_branch
      %57 = sbr.rel (0) target = $region29
    $region28: #{tpu_custom_call.1} parent=1 // pred_region
      %58 = dma.done [#allocation6], 4096
    $region29: #{tpu_custom_call.1} parent=1 // pred_fallthru
      _
    // Predicated region
    $region30: #{tpu_custom_call.1} parent=1 // pred_check
      _
    $region31: #{tpu_custom_call.1} parent=1 // pred_check_branch
      %60 = sbr.rel (0) target = $region33
    $region32: #{tpu_custom_call.1} parent=1 // pred_region
      %61 = dma.done [#allocation6], 1024
    $region33: #{tpu_custom_call.1} parent=1 // pred_fallthru
      _
    %v63 = vld [vmem:[#allocation2] sm:$0xf]
    %v64 = vld [vmem:[#allocation2 + $0x4] sm:$0xf]
    %v65 = vld [vmem:[#allocation2 + $0x8] sm:$0xf]
    %v66 = vld [vmem:[#allocation2 + $0xc] sm:$0xf]
    %v67 = vld [vmem:[#allocation2 + $0x10] sm:$0xf]
    %v68 = vld [vmem:[#allocation2 + $0x14] sm:$0xf]
    %v69 = vld [vmem:[#allocation2 + $0x18] sm:$0xf]
    %v70 = vld [vmem:[#allocation2 + $0x1c] sm:$0xf]
    %v71 = vld [vmem:[#allocation2 + $0x20] sm:$0xf]
    %v72 = vld [vmem:[#allocation2 + $0x24] sm:$0xf]
    %v73 = vld [vmem:[#allocation2 + $0x28] sm:$0xf]
    %v74 = vld [vmem:[#allocation2 + $0x2c] sm:$0xf]
    %v75 = vld [vmem:[#allocation2 + $0x30] sm:$0xf]
    %v76 = vld [vmem:[#allocation2 + $0x34] sm:$0xf]
    %v77 = vld [vmem:[#allocation2 + $0x38] sm:$0xf]
    %v78 = vld [vmem:[#allocation2 + $0x3c] sm:$0xf]
    %v95 = vcombine.low %v63, %v64
    %v96 = vcombine.low %v65, %v66
    %v97 = vcombine.low %v67, %v68
    %v98 = vcombine.low %v69, %v70
    %v100 = vunpack.c.l.s4 1966171168
    %v101 = vunpack.c.0.s8 %v100
    %v102 = vlaneseq
    %v103 = vshrl.u32 %v102, 7
    %v104 = vsub.s32 %v101, %v103
    %v105 = vrot.slane %v95, %v104
    %v107 = vunpack.c.l.s4 1966171168
    %v108 = vunpack.c.0.s8 %v107
    %v109 = vlaneseq
    %v110 = vshrl.u32 %v109, 7
    %v111 = vsub.s32 %v108, %v110
    %v112 = vrot.slane %v96, %v111
    %v114 = vunpack.c.l.s4 1966171168
    %v115 = vunpack.c.0.s8 %v114
    %v116 = vlaneseq
    %v117 = vshrl.u32 %v116, 7
    %v118 = vsub.s32 %v115, %v117
    %v119 = vrot.slane %v97, %v118
    %v121 = vunpack.c.l.s4 1966171168
    %v122 = vunpack.c.0.s8 %v121
    %v123 = vlaneseq
    %v124 = vshrl.u32 %v123, 7
    %v125 = vsub.s32 %v122, %v124
    %v126 = vrot.slane %v98, %v125
    %v127 = vcombine.low %v105, %v112
    %v128 = vcombine.high %v105, %v112
    %v129 = vcombine.low %v119, %v126
    %v130 = vcombine.high %v119, %v126
    %v132 = vunpack.c.l.s4 1966171168
    %v133 = vunpack.c.0.s8 %v132
    %v134 = vlaneseq
    %v135 = vshrl.u32 %v134, 7
    %v136 = vsub.s32 %v133, %v135
    %v137 = vrot.slane %v127, %v136
    %v139 = vunpack.c.l.s4 1966171168
    %v140 = vunpack.c.0.s8 %v139
    %v141 = vlaneseq
    %v142 = vshrl.u32 %v141, 7
    %v143 = vsub.s32 %v140, %v142
    %v144 = vrot.slane %v128, %v143
    %v146 = vunpack.c.l.s4 1966171168
    %v147 = vunpack.c.0.s8 %v146
    %v148 = vlaneseq
    %v149 = vshrl.u32 %v148, 7
    %v150 = vsub.s32 %v147, %v149
    %v151 = vrot.slane %v129, %v150
    %v153 = vunpack.c.l.s4 1966171168
    %v154 = vunpack.c.0.s8 %v153
    %v155 = vlaneseq
    %v156 = vshrl.u32 %v155, 7
    %v157 = vsub.s32 %v154, %v156
    %v158 = vrot.slane %v130, %v157
    %v159 = vcombine.low %v137, %v151
    %v160 = vcombine.high %v137, %v151
    %v161 = vcombine.low %v144, %v158
    %v162 = vcombine.high %v144, %v158
    %v163 = vcombine.low %v71, %v72
    %v164 = vcombine.low %v73, %v74
    %v165 = vcombine.low %v75, %v76
    %v166 = vcombine.low %v77, %v78
    %v168 = vunpack.c.l.s4 1966171168
    %v169 = vunpack.c.0.s8 %v168
    %v170 = vlaneseq
    %v171 = vshrl.u32 %v170, 7
    %v172 = vsub.s32 %v169, %v171
    %v173 = vrot.slane %v163, %v172
    %v175 = vunpack.c.l.s4 1966171168
    %v176 = vunpack.c.0.s8 %v175
    %v177 = vlaneseq
    %v178 = vshrl.u32 %v177, 7
    %v179 = vsub.s32 %v176, %v178
    %v180 = vrot.slane %v164, %v179
    %v182 = vunpack.c.l.s4 1966171168
    %v183 = vunpack.c.0.s8 %v182
    %v184 = vlaneseq
    %v185 = vshrl.u32 %v184, 7
    %v186 = vsub.s32 %v183, %v185
    %v187 = vrot.slane %v165, %v186
    %v189 = vunpack.c.l.s4 1966171168
    %v190 = vunpack.c.0.s8 %v189
    %v191 = vlaneseq
    %v192 = vshrl.u32 %v191, 7
    %v193 = vsub.s32 %v190, %v192
    %v194 = vrot.slane %v166, %v193
    %v195 = vcombine.low %v173, %v180
    %v196 = vcombine.high %v173, %v180
    %v197 = vcombine.low %v187, %v194
    %v198 = vcombine.high %v187, %v194
    %v200 = vunpack.c.l.s4 1966171168
    %v201 = vunpack.c.0.s8 %v200
    %v202 = vlaneseq
    %v203 = vshrl.u32 %v202, 7
    %v204 = vsub.s32 %v201, %v203
    %v205 = vrot.slane %v195, %v204
    %v207 = vunpack.c.l.s4 1966171168
    %v208 = vunpack.c.0.s8 %v207
    %v209 = vlaneseq
    %v210 = vshrl.u32 %v209, 7
    %v211 = vsub.s32 %v208, %v210
    %v212 = vrot.slane %v196, %v211
    %v214 = vunpack.c.l.s4 1966171168
    %v215 = vunpack.c.0.s8 %v214
    %v216 = vlaneseq
    %v217 = vshrl.u32 %v216, 7
    %v218 = vsub.s32 %v215, %v217
    %v219 = vrot.slane %v197, %v218
    %v221 = vunpack.c.l.s4 1966171168
    %v222 = vunpack.c.0.s8 %v221
    %v223 = vlaneseq
    %v224 = vshrl.u32 %v223, 7
    %v225 = vsub.s32 %v222, %v224
    %v226 = vrot.slane %v198, %v225
    %v227 = vcombine.low %v205, %v219
    %v228 = vcombine.high %v205, %v219
    %v229 = vcombine.low %v212, %v226
    %v230 = vcombine.high %v212, %v226
    %v239 = vpack.c.bf16 %v227, %v159
    %v240 = vpack.c.bf16 %v229, %v161
    %v241 = vpack.c.bf16 %v228, %v160
    %v242 = vpack.c.bf16 %v230, %v162
    %v243 = vld [vmem:[#allocation5] sm:$0xf]
    %v244 = vld [vmem:[#allocation5 + $0x4] sm:$0xf]
    %v245 = vld [vmem:[#allocation5 + $0x8] sm:$0xf]
    %v246 = vld [vmem:[#allocation5 + $0xc] sm:$0xf]
    %v247 = vld [vmem:[#allocation5 + $0x10] sm:$0xf]
    %v248 = vld [vmem:[#allocation5 + $0x14] sm:$0xf]
    %v249 = vld [vmem:[#allocation5 + $0x18] sm:$0xf]
    %v250 = vld [vmem:[#allocation5 + $0x1c] sm:$0xf]
    %v251 = vld [vmem:[#allocation5 + $0x20] sm:$0xf]
    %v252 = vld [vmem:[#allocation5 + $0x24] sm:$0xf]
    %v253 = vld [vmem:[#allocation5 + $0x28] sm:$0xf]
    %v254 = vld [vmem:[#allocation5 + $0x2c] sm:$0xf]
    %v255 = vld [vmem:[#allocation5 + $0x30] sm:$0xf]
    %v256 = vld [vmem:[#allocation5 + $0x34] sm:$0xf]
    %v257 = vld [vmem:[#allocation5 + $0x38] sm:$0xf]
    %v258 = vld [vmem:[#allocation5 + $0x3c] sm:$0xf]
    %v259 = vld [vmem:[#allocation5 + $0x40] sm:$0xf]
    %v260 = vld [vmem:[#allocation5 + $0x44] sm:$0xf]
    %v261 = vld [vmem:[#allocation5 + $0x48] sm:$0xf]
    %v262 = vld [vmem:[#allocation5 + $0x4c] sm:$0xf]
    %v263 = vld [vmem:[#allocation5 + $0x50] sm:$0xf]
    %v264 = vld [vmem:[#allocation5 + $0x54] sm:$0xf]
    %v265 = vld [vmem:[#allocation5 + $0x58] sm:$0xf]
    %v266 = vld [vmem:[#allocation5 + $0x5c] sm:$0xf]
    %v267 = vld [vmem:[#allocation5 + $0x60] sm:$0xf]
    %v268 = vld [vmem:[#allocation5 + $0x64] sm:$0xf]
    %v269 = vld [vmem:[#allocation5 + $0x68] sm:$0xf]
    %v270 = vld [vmem:[#allocation5 + $0x6c] sm:$0xf]
    %v271 = vld [vmem:[#allocation5 + $0x70] sm:$0xf]
    %v272 = vld [vmem:[#allocation5 + $0x74] sm:$0xf]
    %v273 = vld [vmem:[#allocation5 + $0x78] sm:$0xf]
    %v274 = vld [vmem:[#allocation5 + $0x7c] sm:$0xf]
    %v275 = vld [vmem:[#allocation5 + $0x80] sm:$0xf]
    %v276 = vld [vmem:[#allocation5 + $0x84] sm:$0xf]
    %v277 = vld [vmem:[#allocation5 + $0x88] sm:$0xf]
    %v278 = vld [vmem:[#allocation5 + $0x8c] sm:$0xf]
    %v279 = vld [vmem:[#allocation5 + $0x90] sm:$0xf]
    %v280 = vld [vmem:[#allocation5 + $0x94] sm:$0xf]
    %v281 = vld [vmem:[#allocation5 + $0x98] sm:$0xf]
    %v282 = vld [vmem:[#allocation5 + $0x9c] sm:$0xf]
    %v283 = vld [vmem:[#allocation5 + $0xa0] sm:$0xf]
    %v284 = vld [vmem:[#allocation5 + $0xa4] sm:$0xf]
    %v285 = vld [vmem:[#allocation5 + $0xa8] sm:$0xf]
    %v286 = vld [vmem:[#allocation5 + $0xac] sm:$0xf]
    %v287 = vld [vmem:[#allocation5 + $0xb0] sm:$0xf]
    %v288 = vld [vmem:[#allocation5 + $0xb4] sm:$0xf]
    %v289 = vld [vmem:[#allocation5 + $0xb8] sm:$0xf]
    %v290 = vld [vmem:[#allocation5 + $0xbc] sm:$0xf]
    %v291 = vld [vmem:[#allocation5 + $0xc0] sm:$0xf]
    %v292 = vld [vmem:[#allocation5 + $0xc4] sm:$0xf]
    %v293 = vld [vmem:[#allocation5 + $0xc8] sm:$0xf]
    %v294 = vld [vmem:[#allocation5 + $0xcc] sm:$0xf]
    %v295 = vld [vmem:[#allocation5 + $0xd0] sm:$0xf]
    %v296 = vld [vmem:[#allocation5 + $0xd4] sm:$0xf]
    %v297 = vld [vmem:[#allocation5 + $0xd8] sm:$0xf]
    %v298 = vld [vmem:[#allocation5 + $0xdc] sm:$0xf]
    %v299 = vld [vmem:[#allocation5 + $0xe0] sm:$0xf]
    %v300 = vld [vmem:[#allocation5 + $0xe4] sm:$0xf]
    %v301 = vld [vmem:[#allocation5 + $0xe8] sm:$0xf]
    %v302 = vld [vmem:[#allocation5 + $0xec] sm:$0xf]
    %v303 = vld [vmem:[#allocation5 + $0xf0] sm:$0xf]
    %v304 = vld [vmem:[#allocation5 + $0xf4] sm:$0xf]
    %v305 = vld [vmem:[#allocation5 + $0xf8] sm:$0xf]
    %v306 = vld [vmem:[#allocation5 + $0xfc] sm:$0xf]
    %v307 = vld [vmem:[%s2] sm:$0x1]
    %v309 = vlaneseq
    %v310 = vshrl.u32 %v309, 7
    %v311 = vsub.s32 0, %v310
    %v312 = vrot.slane %v307, %v311
    %v378 = vunpack.c.l.b16 %v243
    %v379 = vunpack.c.l.b16 %v244
    %v380 = vunpack.c.l.b16 %v245
    %v381 = vunpack.c.l.b16 %v246
    %v382 = vunpack.c.l.b16 %v247
    %v383 = vunpack.c.l.b16 %v248
    %v384 = vunpack.c.l.b16 %v249
    %v385 = vunpack.c.l.b16 %v250
    %v386 = vunpack.c.l.b16 %v251
    %v387 = vunpack.c.l.b16 %v252
    %v388 = vunpack.c.l.b16 %v253
    %v389 = vunpack.c.l.b16 %v254
    %v390 = vunpack.c.l.b16 %v255
    %v391 = vunpack.c.l.b16 %v256
    %v392 = vunpack.c.l.b16 %v257
    %v393 = vunpack.c.l.b16 %v258
    %v394 = vunpack.c.l.b16 %v259
    %v395 = vunpack.c.l.b16 %v260
    %v396 = vunpack.c.l.b16 %v261
    %v397 = vunpack.c.l.b16 %v262
    %v398 = vunpack.c.l.b16 %v263
    %v399 = vunpack.c.l.b16 %v264
    %v400 = vunpack.c.l.b16 %v265
    %v401 = vunpack.c.l.b16 %v266
    %v402 = vunpack.c.l.b16 %v267
    %v403 = vunpack.c.l.b16 %v268
    %v404 = vunpack.c.l.b16 %v269
    %v405 = vunpack.c.l.b16 %v270
    %v406 = vunpack.c.l.b16 %v271
    %v407 = vunpack.c.l.b16 %v272
    %v408 = vunpack.c.l.b16 %v273
    %v409 = vunpack.c.l.b16 %v274
    %v410 = vunpack.c.l.b16 %v275
    %v411 = vunpack.c.l.b16 %v276
    %v412 = vunpack.c.l.b16 %v277
    %v413 = vunpack.c.l.b16 %v278
    %v414 = vunpack.c.l.b16 %v279
    %v415 = vunpack.c.l.b16 %v280
    %v416 = vunpack.c.l.b16 %v281
    %v417 = vunpack.c.l.b16 %v282
    %v418 = vunpack.c.l.b16 %v283
    %v419 = vunpack.c.l.b16 %v284
    %v420 = vunpack.c.l.b16 %v285
    %v421 = vunpack.c.l.b16 %v286
    %v422 = vunpack.c.l.b16 %v287
    %v423 = vunpack.c.l.b16 %v288
    %v424 = vunpack.c.l.b16 %v289
    %v425 = vunpack.c.l.b16 %v290
    %v426 = vunpack.c.l.b16 %v291
    %v427 = vunpack.c.l.b16 %v292
    %v428 = vunpack.c.l.b16 %v293
    %v429 = vunpack.c.l.b16 %v294
    %v430 = vunpack.c.l.b16 %v295
    %v431 = vunpack.c.l.b16 %v296
    %v432 = vunpack.c.l.b16 %v297
    %v433 = vunpack.c.l.b16 %v298
    %v434 = vunpack.c.l.b16 %v299
    %v435 = vunpack.c.l.b16 %v300
    %v436 = vunpack.c.l.b16 %v301
    %v437 = vunpack.c.l.b16 %v302
    %v438 = vunpack.c.l.b16 %v303
    %v439 = vunpack.c.l.b16 %v304
    %v440 = vunpack.c.l.b16 %v305
    %v441 = vunpack.c.l.b16 %v306
    %v442 = vpack.c.b16 %v379, %v378
    %v443 = vpack.c.b16 %v381, %v380
    %v444 = vpack.c.b16 %v383, %v382
    %v445 = vpack.c.b16 %v385, %v384
    %v446 = vpack.c.b16 %v387, %v386
    %v447 = vpack.c.b16 %v389, %v388
    %v448 = vpack.c.b16 %v391, %v390
    %v449 = vpack.c.b16 %v393, %v392
    %v450 = vpack.c.b16 %v395, %v394
    %v451 = vpack.c.b16 %v397, %v396
    %v452 = vpack.c.b16 %v399, %v398
    %v453 = vpack.c.b16 %v401, %v400
    %v454 = vpack.c.b16 %v403, %v402
    %v455 = vpack.c.b16 %v405, %v404
    %v456 = vpack.c.b16 %v407, %v406
    %v457 = vpack.c.b16 %v409, %v408
    %v458 = vpack.c.b16 %v411, %v410
    %v459 = vpack.c.b16 %v413, %v412
    %v460 = vpack.c.b16 %v415, %v414
    %v461 = vpack.c.b16 %v417, %v416
    %v462 = vpack.c.b16 %v419, %v418
    %v463 = vpack.c.b16 %v421, %v420
    %v464 = vpack.c.b16 %v423, %v422
    %v465 = vpack.c.b16 %v425, %v424
    %v466 = vpack.c.b16 %v427, %v426
    %v467 = vpack.c.b16 %v429, %v428
    %v468 = vpack.c.b16 %v431, %v430
    %v469 = vpack.c.b16 %v433, %v432
    %v470 = vpack.c.b16 %v435, %v434
    %v471 = vpack.c.b16 %v437, %v436
    %v472 = vpack.c.b16 %v439, %v438
    %v473 = vpack.c.b16 %v441, %v440
    %506 = vmatprep.subr.bf16.mxu0 0
    %507 = vmatpush1.bf16.msra.mxu0 %v442
    %508 = vmatprep.subr.bf16.mxu0 0
    %509 = vmatpush1.bf16.msra.mxu0 %v443
    %510 = vmatprep.subr.bf16.mxu0 0
    %511 = vmatpush1.bf16.msra.mxu0 %v444
    %512 = vmatprep.subr.bf16.mxu0 0
    %513 = vmatpush1.bf16.msra.mxu0 %v445
    %514 = vmatprep.subr.bf16.mxu0 0
    %515 = vmatpush1.bf16.msra.mxu0 %v446
    %516 = vmatprep.subr.bf16.mxu0 0
    %517 = vmatpush1.bf16.msra.mxu0 %v447
    %518 = vmatprep.subr.bf16.mxu0 0
    %519 = vmatpush1.bf16.msra.mxu0 %v448
    %520 = vmatprep.subr.bf16.mxu0 0
    %521 = vmatpush1.bf16.msra.mxu0 %v449
    %522 = vmatprep.subr.bf16.mxu0 0
    %523 = vmatpush1.bf16.msra.mxu0 %v450
    %524 = vmatprep.subr.bf16.mxu0 0
    %525 = vmatpush1.bf16.msra.mxu0 %v451
    %526 = vmatprep.subr.bf16.mxu0 0
    %527 = vmatpush1.bf16.msra.mxu0 %v452
    %528 = vmatprep.subr.bf16.mxu0 0
    %529 = vmatpush1.bf16.msra.mxu0 %v453
    %530 = vmatprep.subr.bf16.mxu0 0
    %531 = vmatpush1.bf16.msra.mxu0 %v454
    %532 = vmatprep.subr.bf16.mxu0 0
    %533 = vmatpush1.bf16.msra.mxu0 %v455
    %534 = vmatprep.subr.bf16.mxu0 0
    %535 = vmatpush1.bf16.msra.mxu0 %v456
    %536 = vmatprep.subr.bf16.mxu0 0
    %537 = vmatpush1.bf16.msra.mxu0 %v457
    %538 = vmatprep.mubr.bf16.mxu0 %v240
    %539 = vmatmul.mubr.bf16.gmra.mrb[0].mxu0 %v239
    %v540 = vpop.f32.mrb[0].mxu0
    %v541 = vadd.f32 %v312, %v540
    %v542 = vpop.f32.mrb[0].mxu0
    %v543 = vpop.f32.mrb[0].mxu0
    %v544 = vadd.f32 %v312, %v543
    %v545 = vpop.f32.mrb[0].mxu0
    %546 = vdwg.mxu0
    %547 = vmatprep.subr.bf16.mxu0 0
    %548 = vmatpush1.bf16.msra.mxu0 %v458
    %549 = vmatprep.subr.bf16.mxu0 0
    %550 = vmatpush1.bf16.msra.mxu0 %v459
    %551 = vmatprep.subr.bf16.mxu0 0
    %552 = vmatpush1.bf16.msra.mxu0 %v460
    %553 = vmatprep.subr.bf16.mxu0 0
    %554 = vmatpush1.bf16.msra.mxu0 %v461
    %555 = vmatprep.subr.bf16.mxu0 0
    %556 = vmatpush1.bf16.msra.mxu0 %v462
    %557 = vmatprep.subr.bf16.mxu0 0
    %558 = vmatpush1.bf16.msra.mxu0 %v463
    %559 = vmatprep.subr.bf16.mxu0 0
    %560 = vmatpush1.bf16.msra.mxu0 %v464
    %561 = vmatprep.subr.bf16.mxu0 0
    %562 = vmatpush1.bf16.msra.mxu0 %v465
    %563 = vmatprep.subr.bf16.mxu0 0
    %564 = vmatpush1.bf16.msra.mxu0 %v466
    %565 = vmatprep.subr.bf16.mxu0 0
    %566 = vmatpush1.bf16.msra.mxu0 %v467
    %567 = vmatprep.subr.bf16.mxu0 0
    %568 = vmatpush1.bf16.msra.mxu0 %v468
    %569 = vmatprep.subr.bf16.mxu0 0
    %570 = vmatpush1.bf16.msra.mxu0 %v469
    %571 = vmatprep.subr.bf16.mxu0 0
    %572 = vmatpush1.bf16.msra.mxu0 %v470
    %573 = vmatprep.subr.bf16.mxu0 0
    %574 = vmatpush1.bf16.msra.mxu0 %v471
    %575 = vmatprep.subr.bf16.mxu0 0
    %576 = vmatpush1.bf16.msra.mxu0 %v472
    %577 = vmatprep.subr.bf16.mxu0 0
    %578 = vmatpush1.bf16.msra.mxu0 %v473
    %579 = vmatprep.mubr.bf16.mxu0 %v242
    %580 = vmatmul.mubr.bf16.gmra.mrb[0].mxu0 %v241
    %v581 = vpop.f32.mrb[0].mxu0
    %v582 = vadd.f32 %v541, %v581
    %v583 = vpop.f32.mrb[0].mxu0
    %v584 = vpop.f32.mrb[0].mxu0
    %v585 = vadd.f32 %v544, %v584
    %v586 = vpop.f32.mrb[0].mxu0
    %587 = vdwg.mxu0
    %v588 = vmax.f32 %v582, 0.0
    %v589 = vmax.f32 %v585, 0.0
    %v590 = vpack.c.bf16 %v589, %v588
    %v591 = vld [vmem:[#allocation7] sm:$0xf]
    %v592 = vld [vmem:[#allocation7 + $0x4] sm:$0xf]
    %v593 = vld [vmem:[#allocation7 + $0x8] sm:$0xf]
    %v594 = vld [vmem:[#allocation7 + $0xc] sm:$0xf]
    %v595 = vld [vmem:[#allocation7 + $0x10] sm:$0xf]
    %v596 = vld [vmem:[#allocation7 + $0x14] sm:$0xf]
    %v597 = vld [vmem:[#allocation7 + $0x18] sm:$0xf]
    %v598 = vld [vmem:[#allocation7 + $0x1c] sm:$0xf]
    %v599 = vld [vmem:[#allocation7 + $0x20] sm:$0xf]
    %v600 = vld [vmem:[#allocation7 + $0x24] sm:$0xf]
    %v601 = vld [vmem:[#allocation7 + $0x28] sm:$0xf]
    %v602 = vld [vmem:[#allocation7 + $0x2c] sm:$0xf]
    %v603 = vld [vmem:[#allocation7 + $0x30] sm:$0xf]
    %v604 = vld [vmem:[#allocation7 + $0x34] sm:$0xf]
    %v605 = vld [vmem:[#allocation7 + $0x38] sm:$0xf]
    %v606 = vld [vmem:[#allocation7 + $0x3c] sm:$0xf]
    %v607 = vld [vmem:[%s4] sm:$0x1]
    %v609 = vlaneseq
    %v610 = vshrl.u32 %v609, 7
    %v611 = vsub.s32 0, %v610
    %v612 = vrot.slane %v607, %v611
    %v630 = vunpack.c.l.b16 %v591
    %v631 = vunpack.c.l.b16 %v592
    %v632 = vunpack.c.l.b16 %v593
    %v633 = vunpack.c.l.b16 %v594
    %v634 = vunpack.c.l.b16 %v595
    %v635 = vunpack.c.l.b16 %v596
    %v636 = vunpack.c.l.b16 %v597
    %v637 = vunpack.c.l.b16 %v598
    %v638 = vunpack.c.l.b16 %v599
    %v639 = vunpack.c.l.b16 %v600
    %v640 = vunpack.c.l.b16 %v601
    %v641 = vunpack.c.l.b16 %v602
    %v642 = vunpack.c.l.b16 %v603
    %v643 = vunpack.c.l.b16 %v604
    %v644 = vunpack.c.l.b16 %v605
    %v645 = vunpack.c.l.b16 %v606
    %v646 = vpack.c.b16 %v631, %v630
    %v647 = vpack.c.b16 %v633, %v632
    %v648 = vpack.c.b16 %v635, %v634
    %v649 = vpack.c.b16 %v637, %v636
    %v650 = vpack.c.b16 %v639, %v638
    %v651 = vpack.c.b16 %v641, %v640
    %v652 = vpack.c.b16 %v643, %v642
    %v653 = vpack.c.b16 %v645, %v644
    %662 = vmatprep.subr.bf16.mxu0 0
    %663 = vmatpush1.bf16.msra.mxu0 %v646
    %664 = vmatprep.subr.bf16.mxu0 0
    %665 = vmatpush1.bf16.msra.mxu0 %v647
    %666 = vmatprep.subr.bf16.mxu0 0
    %667 = vmatpush1.bf16.msra.mxu0 %v648
    %668 = vmatprep.subr.bf16.mxu0 0
    %669 = vmatpush1.bf16.msra.mxu0 %v649
    %670 = vmatprep.subr.bf16.mxu0 0
    %671 = vmatpush1.bf16.msra.mxu0 %v650
    %672 = vmatprep.subr.bf16.mxu0 0
    %673 = vmatpush1.bf16.msra.mxu0 %v651
    %674 = vmatprep.subr.bf16.mxu0 0
    %675 = vmatpush1.bf16.msra.mxu0 %v652
    %676 = vmatprep.subr.bf16.mxu0 0
    %677 = vmatpush1.bf16.msra.mxu0 %v653
    %678 = vmatprep.subr.bf16.mxu0 0
    %679 = vmatpush1.bf16.msra.mxu0 0
    %680 = vmatprep.subr.bf16.mxu0 0
    %681 = vmatpush1.bf16.msra.mxu0 0
    %682 = vmatprep.subr.bf16.mxu0 0
    %683 = vmatpush1.bf16.msra.mxu0 0
    %684 = vmatprep.subr.bf16.mxu0 0
    %685 = vmatpush1.bf16.msra.mxu0 0
    %686 = vmatprep.subr.bf16.mxu0 0
    %687 = vmatpush1.bf16.msra.mxu0 0
    %688 = vmatprep.subr.bf16.mxu0 0
    %689 = vmatpush1.bf16.msra.mxu0 0
    %690 = vmatprep.subr.bf16.mxu0 0
    %691 = vmatpush1.bf16.msra.mxu0 0
    %692 = vmatprep.subr.bf16.mxu0 0
    %693 = vmatpush1.bf16.msra.mxu0 0
    %694 = vmatprep.mubr.bf16.mxu0 0
    %695 = vmatmul.mubr.bf16.gmra.mrb[0].mxu0 %v590
    %v696 = vpop.f32.mrb[0].mxu0
    %v697 = vadd.f32 %v612, %v696
    %v698 = vpop.f32.mrb[0].mxu0
    %v699 = vpop.f32.mrb[0].mxu0
    %v700 = vadd.f32 %v612, %v699
    %v701 = vpop.f32.mrb[0].mxu0
    %702 = vdwg.mxu0
    %v703 = vpack.c.bf16 %v700, %v697
    %v705 = vcombine.high %v703, %v703
    %v707 = vunpack.c.l.s4 1966171168
    %v708 = vunpack.c.0.s8 %v707
    %v709 = vlaneseq
    %v710 = vshrl.u32 %v709, 7
    %v711 = vsub.s32 %v708, %v710
    %v712 = vrot.slane %v703, %v711
    %v714 = vunpack.c.l.s4 1966171168
    %v715 = vunpack.c.0.s8 %v714
    %v716 = vlaneseq
    %v717 = vshrl.u32 %v716, 7
    %v718 = vsub.s32 %v715, %v717
    %v719 = vrot.slane %v705, %v718
    %v720 = vcombine.high %v712, %v712
    %v721 = vcombine.high %v719, %v719
    %v723 = vunpack.c.l.s4 1966171168
    %v724 = vunpack.c.0.s8 %v723
    %v725 = vlaneseq
    %v726 = vshrl.u32 %v725, 7
    %v727 = vsub.s32 %v724, %v726
    %v728 = vrot.slane %v712, %v727
    %v730 = vunpack.c.l.s4 1966171168
    %v731 = vunpack.c.0.s8 %v730
    %v732 = vlaneseq
    %v733 = vshrl.u32 %v732, 7
    %v734 = vsub.s32 %v731, %v733
    %v735 = vrot.slane %v719, %v734
    %v737 = vunpack.c.l.s4 1966171168
    %v738 = vunpack.c.0.s8 %v737
    %v739 = vlaneseq
    %v740 = vshrl.u32 %v739, 7
    %v741 = vsub.s32 %v738, %v740
    %v742 = vrot.slane %v720, %v741
    %v744 = vunpack.c.l.s4 1966171168
    %v745 = vunpack.c.0.s8 %v744
    %v746 = vlaneseq
    %v747 = vshrl.u32 %v746, 7
    %v748 = vsub.s32 %v745, %v747
    %v749 = vrot.slane %v721, %v748
    %v750 = vcombine.high %v728, %v728
    %v751 = vcombine.high %v735, %v735
    %v752 = vcombine.high %v742, %v742
    %v753 = vcombine.high %v749, %v749
    %762 = vst [vmem:[#allocation8] sm:$0x1] %v728
    %763 = vst [vmem:[#allocation8 + $0x1] sm:$0x1] %v742
    %764 = vst [vmem:[#allocation8 + $0x2] sm:$0x1] %v750
    %765 = vst [vmem:[#allocation8 + $0x3] sm:$0x1] %v752
    %766 = vst [vmem:[#allocation8 + $0x4] sm:$0x1] %v735
    %767 = vst [vmem:[#allocation8 + $0x5] sm:$0x1] %v749
    %768 = vst [vmem:[#allocation8 + $0x6] sm:$0x1] %v751
    %769 = vst [vmem:[#allocation8 + $0x7] sm:$0x1] %v753
    // Predicated region
    $region34: #{tpu_custom_call.1} parent=1 // pred_check
      _
    $region35: #{tpu_custom_call.1} parent=1 // pred_check_branch
      %771 = sbr.rel (0) target = $region37
    $region36: #{tpu_custom_call.1} parent=1 // pred_region
      %s773 = ssub.s32 128, 16
      %774 = vsyncadd [#allocation4], %s773
      %s775 = sshll.u32 [#allocation8], 4
      %s776 = int_to_ptr.vmem [resolvable:$true] %s775
      %781 = dma.vmem_to_hbm [thread:$0]  %s776, 16, %s5, [#allocation4], 16, 16, 1
    $region37: #{tpu_custom_call.1} parent=1 // pred_fallthru
      _
    // Predicated region
    $region38: #{tpu_custom_call.1} parent=1 // pred_check
      _
    $region39: #{tpu_custom_call.1} parent=1 // pred_check_branch
      %783 = sbr.rel (0) target = $region41
    $region40: #{tpu_custom_call.1} parent=1 // pred_region
      %784 = dma.done [#allocation4], 128
    $region41: #{tpu_custom_call.1} parent=1 // pred_fallthru
      _
    %785 = vsyncpa [#allocation3], 1
    %786 = vsyncpa [#allocation6], 1
    %787 = vsyncpa [#allocation4], 1

</llo_original>
